<compile_context>
chip_gen: v7x
topology: tpu7x:2x2x1
jax: 0.10.0
libtpu: 0.0.40
codegen_flags: <defaults>
</compile_context>

<pallas_src>
import functools

import jax
import jax.numpy as jnp
from jax.experimental import pallas as pl
from jax.experimental.pallas import tpu as pltpu

# LIF constants (module defaults)
ALPHA = 0.9
ALPHARP = 0.65
WRP = 1.0
BETA = 0.85
TAU_M = 1.0 / (1.0 - ALPHA)   # = 10.0
TAU_S = 1.0 / (1.0 - BETA)    # = 6.666...


# --------------------------------- kernel ----------------------------------

def _lif_seq_kernel(sin_ref, w_ref, b_ref,
                    s_seq_ref, u_seq_ref, p_fin_ref, q_fin_ref, r_fin_ref,
                    p_sc, q_sc, r_sc, s_sc, taps_sc,
                    *, kh, kw, img_w):
    """Grid point (b, t): one timestep of one batch block.

    sin_ref          : (Cin,  L) spikes (bf16/f32), L = block_batch * H * W
    w_ref            : (Cout, KH*KW*Cin) stacked conv weight
    b_ref            : (Cout, 1) bias
    s_seq/u_seq      : (Cout, L) per-step outputs
    p/q/r_fin        : final state outputs (resident across the t axis)
    p/q/r/s_sc       : LIF state in VMEM, carried across the "arbitrary" t axis
    taps_sc          : (KH*KW*Cin, L) stacked im2col scratch
    """
    t = pl.program_id(1)

    @pl.when(t == 0)
    def _():
        # Fresh zero state at the start of every batch block's time loop,
        # matching LIFLayer.init_state.
        p_sc[...] = jnp.zeros_like(p_sc)
        q_sc[...] = jnp.zeros_like(q_sc)
        r_sc[...] = jnp.zeros_like(r_sc)
        s_sc[...] = jnp.zeros_like(s_sc)

    sin = sin_ref[...].astype(jnp.float32)   # binary spikes: bf16 -> f32 lossless
    p = p_sc[...]
    q = q_sc[...]

    # --- elementwise LIF state update (VPU, lane-dense, all f32) ---
    q_new = BETA * q + TAU_S * sin
    p_new = ALPHA * p + TAU_M * q            # uses OLD Q (PyTorch semantics)
    r_new = ALPHARP * r_sc[...] - WRP * s_sc[...]

    cin, lanes = p_new.shape

    # --- conv2d(P') as one stacked matmul ---
    # im2col: tap (i, j) is a lane roll of P' (XLU, cheap); taps are stacked
    # along sublanes so the MXU sees a single K = KH*KW*Cin contraction.
    for idx in range(kh * kw):
        i, j = divmod(idx, kw)
        shift = i * img_w + j
        # tap[f] = p_new[f + shift]; the wrap only produces "don't care" lanes.
        tap = p_new if shift == 0 else pltpu.roll(p_new, lanes - shift, 1)
        taps_sc[idx * cin:(idx + 1) * cin, :] = tap

    u = (jnp.dot(w_ref[...], taps_sc[...], preferred_element_type=jnp.float32)
         + b_ref[...] + r_new)
    s_new = (u >= 0.0).astype(jnp.float32)   # SmoothStep forward

    # --- stream per-step outputs ---
    s_seq_ref[...] = s_new.astype(s_seq_ref.dtype)
    u_seq_ref[...] = u

    # --- carry state in VMEM across the time axis ---
    p_sc[...] = p_new
    q_sc[...] = q_new
    r_sc[...] = r_new
    s_sc[...] = s_new

    # --- final state, written back once per batch block ---
    @pl.when(t == pl.num_programs(1) - 1)
    def _():
        p_fin_ref[...] = p_new
        q_fin_ref[...] = q_new
        r_fin_ref[...] = r_new


# ----------------------------- layout helpers -------------------------------

def prepare_conv_params(w_oihw, bias):
    """Hoistable (constant across timesteps) weight / bias layout prep."""
    cout, cin, kh, kw = w_oihw.shape
    # OIHW -> (Cout, KH, KW, Cin) -> (Cout, KH*KW*Cin): contraction index
    # k = (i*KW + j)*Cin + c matches the tap stacking order built in-kernel.
    w_stack = jnp.transpose(w_oihw, (0, 2, 3, 1)).reshape(cout, kh * kw * cin)
    return w_stack.astype(jnp.float32), bias.astype(jnp.float32).reshape(cout, 1)


def seq_nchw_to_lanes(x, dtype):
    """(T, N, C, H, W) -> (T, C, N*H*W): batch*spatial on the 128-lane axis."""
    t, n, c, h, w = x.shape
    return jnp.transpose(x, (0, 2, 1, 3, 4)).reshape(t, c, n * h * w).astype(dtype)


def seq_lanes_to_nchw(x, n, h, w, ho, wo):
    """(T, C, N*H*W) -> (T, N, C, Ho, Wo): crop the valid conv output window."""
    t, c, _ = x.shape
    return jnp.transpose(x.reshape(t, c, n, h, w), (0, 2, 1, 3, 4))[..., :ho, :wo]


def lanes_to_nchw(x, n, h, w):
    c = x.shape[0]
    return jnp.transpose(x.reshape(c, n, h, w), (1, 0, 2, 3))


def out_lanes_to_nchw(x, n, h, w, ho, wo):
    return lanes_to_nchw(x, n, h, w)[:, :, :ho, :wo]


# -------------------------- block / VMEM sizing ------------------------------

def _vmem_budget_bytes():
    """Generation-aware VMEM budget for block sizing (v5e/v6e: 128 MiB,
    v7x: 64 MiB physical).  Conservative: a quarter of capacity, 8 MiB fallback
    (safe under every generation's default scoped limit)."""
    try:
        info = pltpu.get_tpu_info()
        cap = getattr(info, "vmem_capacity_bytes", None)
        if cap:
            return max(int(cap) // 4, 4 << 20)
    except Exception:
        pass
    return 8 << 20


def _block_vmem_bytes(lanes, cin, cout, khkw, spike_bytes):
    """Rough per-batch-block VMEM footprint: double-buffered streaming blocks
    + resident final-state outputs + state / im2col scratch (sublane-padded)."""
    pad8 = lambda x: -(-x // 8) * 8
    stream = 2 * lanes * (pad8(cin) * spike_bytes      # Sin in
                          + pad8(cout) * spike_bytes   # S out
                          + pad8(cout) * 4)            # U out
    resident = 2 * lanes * 4 * (2 * pad8(cin) + pad8(cout))            # final P/Q/R
    scratch = lanes * 4 * (2 * pad8(cin) + 2 * pad8(cout) + pad8(khkw * cin))
    return stream + resident + scratch


def _choose_block_batch(n, hw, cin, cout, khkw, spike_bytes, budget, min_blocks=1):
    """Largest batch block that divides N, keeps the lane block a multiple of
    128 (or full extent), fits the VMEM budget, and leaves >= min_blocks grid
    blocks.  Single-TC chips (v5e/v6e) want min_blocks=1 (extra grid steps are
    pure overhead); on 2-TC v7x set min_blocks=2 only once per-block work is
    several microseconds."""
    best = 1
    for bn in range(1, n + 1):
        if n % bn or (n // bn) < min_blocks:
            continue
        lanes = bn * hw
        if lanes % 128 != 0 and bn != n:
            continue
        if _block_vmem_bytes(lanes, cin, cout, khkw, spike_bytes) <= budget:
            best = bn
    return best


# ----------------------------- fused forward --------------------------------

def lif_forward_sequence(sin_seq_nchw, w_oihw, bias, *,
                         spike_dtype=jnp.bfloat16, min_grid_blocks=1):
    """LIFLayer forward over a whole spike train in ONE pallas_call.

    Equivalent to T successive LIFLayer.forward calls starting from the zero
    state created by LIFLayer.init_state.

      sin_seq_nchw: (T, N, Cin, H, W) binary spike train (values in {0, 1})
      w_oihw      : (Cout, Cin, KH, KW) conv weight;  bias: (Cout,)

    Returns (S_seq, U_seq, P_fin, Q_fin, R_fin, S_fin) in NCHW layouts.

    `spike_dtype` narrows only the binary Sin / S HBM streams (lossless for
    0/1); all arithmetic stays float32.  Use jnp.float32 for non-binary inputs.
    """
    f32 = jnp.float32
    t_len, n, cin, h, w = sin_seq_nchw.shape
    cout, wcin, kh, kw = w_oihw.shape
    assert wcin == cin
    ho, wo = h - kh + 1, w - kw + 1
    hw = h * w
    total = n * hw

    w_stack, b_col = prepare_conv_params(w_oihw, bias)
    sin_l = seq_nchw_to_lanes(sin_seq_nchw, spike_dtype)   # (T, Cin, total)

    spike_bytes = jnp.dtype(spike_dtype).itemsize
    bn = _choose_block_batch(n, hw, cin, cout, kh * kw, spike_bytes,
                             _vmem_budget_bytes(), min_grid_blocks)
    lanes = bn * hw
    # Batch blocks ("parallel") outer, time ("arbitrary") inner/last: state
    # scratch is carried across t and reset at t == 0 for each batch block.
    grid = (n // bn, t_len)

    kernel = functools.partial(_lif_seq_kernel, kh=kh, kw=kw, img_w=w)

    seq_in = pl.BlockSpec((None, cin, lanes), lambda b, t: (t, 0, b))
    seq_s = pl.BlockSpec((None, cout, lanes), lambda b, t: (t, 0, b))
    seq_u = pl.BlockSpec((None, cout, lanes), lambda b, t: (t, 0, b))
    fin_pq = pl.BlockSpec((cin, lanes), lambda b, t: (0, b))    # resident over t
    fin_r = pl.BlockSpec((cout, lanes), lambda b, t: (0, b))    # resident over t
    w_spec = pl.BlockSpec((cout, kh * kw * cin), lambda b, t: (0, 0))
    b_spec = pl.BlockSpec((cout, 1), lambda b, t: (0, 0))

    grid_spec = pltpu.PrefetchScalarGridSpec(
        num_scalar_prefetch=0,
        grid=grid,
        in_specs=[seq_in, w_spec, b_spec],
        out_specs=[seq_s, seq_u, fin_pq, fin_pq, fin_r],
        scratch_shapes=[
            pltpu.VMEM((cin, lanes), f32),             # P state
            pltpu.VMEM((cin, lanes), f32),             # Q state
            pltpu.VMEM((cout, lanes), f32),            # R state
            pltpu.VMEM((cout, lanes), f32),            # S state (previous spikes)
            pltpu.VMEM((kh * kw * cin, lanes), f32),   # stacked im2col taps
        ])

    out_shapes = (
        jax.ShapeDtypeStruct((t_len, cout, total), spike_dtype),  # S per step
        jax.ShapeDtypeStruct((t_len, cout, total), f32),          # U per step
        jax.ShapeDtypeStruct((cin, total), f32),                  # final P
        jax.ShapeDtypeStruct((cin, total), f32),                  # final Q
        jax.ShapeDtypeStruct((cout, total), f32),                 # final R
    )

    s_l, u_l, p_l, q_l, r_l = pl.pallas_call(
        kernel,
        out_shape=out_shapes,
        grid_spec=grid_spec,
        compiler_params=pltpu.CompilerParams(
            dimension_semantics=("parallel", "arbitrary")),
    )(sin_l, w_stack, b_col)

    s_seq = seq_lanes_to_nchw(s_l.astype(f32), n, h, w, ho, wo)
    u_seq = seq_lanes_to_nchw(u_l, n, h, w, ho, wo)
    p_fin = lanes_to_nchw(p_l, n, h, w)
    q_fin = lanes_to_nchw(q_l, n, h, w)
    r_fin = out_lanes_to_nchw(r_l, n, h, w, ho, wo)
    return s_seq, u_seq, p_fin, q_fin, r_fin, s_seq[-1]


# ------------------------------- reference ----------------------------------

def lif_layer_forward_ref(sin_nchw, p, q, r, s, w_oihw, bias):
    """Pure-JAX single-step reference matching LIFLayer.forward (NCHW)."""
    q_new = BETA * q + TAU_S * sin_nchw
    p_new = ALPHA * p + TAU_M * q
    r_new = ALPHARP * r - s * WRP
    conv = jax.lax.conv_general_dilated(
        p_new, w_oihw, window_strides=(1, 1), padding="VALID",
        dimension_numbers=("NCHW", "OIHW", "NCHW"))
    u = conv + bias.reshape(1, -1, 1, 1) + r_new
    s_new = (u >= 0.0).astype(jnp.float32)
    return s_new, u, p_new, q_new, r_new


if __name__ == "__main__":
    key = jax.random.PRNGKey(0)
    k_w, k_b, k_in = jax.random.split(key, 3)

    # Small shapes: T=8 timesteps, batch=2, Cin=4, 16x16 spatial, Conv2d(4->8, 3x3).
    T, N, Cin, H, W = 8, 2, 4, 16, 16
    Cout, KH, KW = 8, 3, 3
    Ho, Wo = H - KH + 1, W - KW + 1

    fan_in = Cin * KH * KW
    bound = 1.0 / (fan_in ** 0.5)
    w_oihw = jax.random.uniform(k_w, (Cout, Cin, KH, KW), jnp.float32,
                                minval=-bound, maxval=bound)
    bias = jax.random.uniform(k_b, (Cout,), jnp.float32,
                              minval=-bound, maxval=bound)
    sin_seq = jax.random.bernoulli(k_in, 0.3, (T, N, Cin, H, W)).astype(jnp.float32)

    # --- Pallas: whole spike train in one fused pallas_call ---
    fwd = jax.jit(lif_forward_sequence)
    S_seq, U_seq, P_fin, Q_fin, R_fin, S_fin = fwd(sin_seq, w_oihw, bias)
    jax.block_until_ready((S_seq, U_seq, P_fin, Q_fin, R_fin, S_fin))

    # --- pure-JAX reference: T successive module-forward steps ---
    p = jnp.zeros((N, Cin, H, W), jnp.float32)
    q = jnp.zeros((N, Cin, H, W), jnp.float32)
    r = jnp.zeros((N, Cout, Ho, Wo), jnp.float32)
    s = jnp.zeros((N, Cout, Ho, Wo), jnp.float32)
    ref_S, ref_U = [], []
    for t in range(T):
        s, u, p, q, r = lif_layer_forward_ref(sin_seq[t], p, q, r, s, w_oihw, bias)
        ref_S.append(s)
        ref_U.append(u)
    ref_S = jnp.stack(ref_S)
    ref_U = jnp.stack(ref_U)

    # Positions whose |U| ever gets close to the spike threshold can legitimately
    # flip between implementations (float rounding); a flip contaminates only
    # that same output pixel at later steps (R/S updates are elementwise and the
    # conv reads only P), so mask those trajectories out of the comparison.
    # Step 0 is exact in both implementations (U == bias, conv of zeros).
    near = jnp.abs(ref_U) < 1e-2
    near = near.at[0].set(False)
    safe = jnp.cumsum(near.astype(jnp.int32), axis=0) == 0

    tol_u = 5e-3 + 1e-3 * jnp.abs(ref_U)
    assert bool(jnp.all(jnp.where(safe, jnp.abs(U_seq - ref_U) <= tol_u, True))), \
        "U mismatch vs reference"
    assert bool(jnp.all(jnp.where(safe, S_seq == ref_S, True))), \
        "spike mismatch vs reference"
    assert jnp.allclose(P_fin, p, atol=1e-3, rtol=1e-4), "final P mismatch"
    assert jnp.allclose(Q_fin, q, atol=1e-3, rtol=1e-4), "final Q mismatch"
    tol_r = 5e-3 + 1e-3 * jnp.abs(r)
    assert bool(jnp.all(jnp.where(safe[-1], jnp.abs(R_fin - r) <= tol_r, True))), \
        "final R mismatch"
    assert bool(jnp.all(jnp.where(safe[-1], S_fin == ref_S[-1], True))), \
        "final S mismatch"

    print("KERNEL_OK")
</pallas_src>

<mosaic_0001>
module attributes {stable_mosaic.version = 11 : i64} {
  func.func @_lif_seq_kernel(%arg0: i32, %arg1: i32, %arg2: memref<1x4x512xbf16, #tpu.memory_space<vmem>>, %arg3: memref<8x36xf32, #tpu.memory_space<vmem>>, %arg4: memref<8x1xf32, #tpu.memory_space<vmem>>, %arg5: memref<1x8x512xbf16, #tpu.memory_space<vmem>>, %arg6: memref<1x8x512xf32, #tpu.memory_space<vmem>>, %arg7: memref<4x512xf32, #tpu.memory_space<vmem>>, %arg8: memref<4x512xf32, #tpu.memory_space<vmem>>, %arg9: memref<8x512xf32, #tpu.memory_space<vmem>>, %arg10: memref<4x512xf32, #tpu.memory_space<vmem>>, %arg11: memref<4x512xf32, #tpu.memory_space<vmem>>, %arg12: memref<8x512xf32, #tpu.memory_space<vmem>>, %arg13: memref<8x512xf32, #tpu.memory_space<vmem>>, %arg14: memref<36x512xf32, #tpu.memory_space<vmem>>) attributes {dimension_semantics = [#tpu.dimension_semantics<parallel>, #tpu.dimension_semantics<arbitrary>], iteration_bounds = array<i64: 1, 8>, scalar_prefetch = 0 : i64, scratch_operands = 5 : i64, tpu.core_type = #tpu.core_type<tc>, window_params = [{transform_indices = @transform_0, window_bounds = array<i64: 1, 4, 512>}, {pipeline_mode = #tpu.pipeline_mode<synchronous>, transform_indices = @transform_1, window_bounds = array<i64: 8, 36>}, {pipeline_mode = #tpu.pipeline_mode<synchronous>, transform_indices = @transform_2, window_bounds = array<i64: 8, 1>}, {transform_indices = @transform_3, window_bounds = array<i64: 1, 8, 512>}, {transform_indices = @transform_4, window_bounds = array<i64: 1, 8, 512>}, {transform_indices = @transform_5, window_bounds = array<i64: 4, 512>}, {transform_indices = @transform_6, window_bounds = array<i64: 4, 512>}, {transform_indices = @transform_7, window_bounds = array<i64: 8, 512>}]} {
    %c0_i32 = arith.constant 0 : i32
    %0 = arith.cmpi eq, %arg1, %c0_i32 : i32
    %1 = arith.extui %0 : i1 to i32
    %c0_i32_0 = arith.constant 0 : i32
    %2 = arith.cmpi ne, %1, %c0_i32_0 : i32
    scf.if %2 {
      %cst_49 = arith.constant 0.000000e+00 : f32
      %67 = vector.broadcast %cst_49 : f32 to vector<4x512xf32>
      %c0_50 = arith.constant 0 : index
      %c0_51 = arith.constant 0 : index
      %68 = vector.load %arg10[%c0_50, %c0_51] : memref<4x512xf32, #tpu.memory_space<vmem>>, vector<4x512xf32>
      tpu.vector_store %arg10[%c0_50, %c0_51], %67 {strides = array<i32>} : memref<4x512xf32, #tpu.memory_space<vmem>>, vector<4x512xf32>,
      %cst_52 = arith.constant 0.000000e+00 : f32
      %69 = vector.broadcast %cst_52 : f32 to vector<4x512xf32>
      %c0_53 = arith.constant 0 : index
      %c0_54 = arith.constant 0 : index
      %70 = vector.load %arg11[%c0_53, %c0_54] : memref<4x512xf32, #tpu.memory_space<vmem>>, vector<4x512xf32>
      tpu.vector_store %arg11[%c0_53, %c0_54], %69 {strides = array<i32>} : memref<4x512xf32, #tpu.memory_space<vmem>>, vector<4x512xf32>,
      %cst_55 = arith.constant 0.000000e+00 : f32
      %71 = vector.broadcast %cst_55 : f32 to vector<8x512xf32>
      %c0_56 = arith.constant 0 : index
      %c0_57 = arith.constant 0 : index
      %72 = vector.load %arg12[%c0_56, %c0_57] : memref<8x512xf32, #tpu.memory_space<vmem>>, vector<8x512xf32>
      tpu.vector_store %arg12[%c0_56, %c0_57], %71 {strides = array<i32>} : memref<8x512xf32, #tpu.memory_space<vmem>>, vector<8x512xf32>,
      %cst_58 = arith.constant 0.000000e+00 : f32
      %73 = vector.broadcast %cst_58 : f32 to vector<8x512xf32>
      %c0_59 = arith.constant 0 : index
      %c0_60 = arith.constant 0 : index
      %74 = vector.load %arg13[%c0_59, %c0_60] : memref<8x512xf32, #tpu.memory_space<vmem>>, vector<8x512xf32>
      tpu.vector_store %arg13[%c0_59, %c0_60], %73 {strides = array<i32>} : memref<8x512xf32, #tpu.memory_space<vmem>>, vector<8x512xf32>,
    } else {
    }
    %c0 = arith.constant 0 : index
    %c0_1 = arith.constant 0 : index
    %c0_2 = arith.constant 0 : index
    %3 = vector.load %arg2[%c0, %c0_1, %c0_2] : memref<1x4x512xbf16, #tpu.memory_space<vmem>>, vector<1x4x512xbf16>
    %4 = vector.shape_cast %3 : vector<1x4x512xbf16> to vector<4x512xbf16>
    %5 = arith.extf %4 : vector<4x512xbf16> to vector<4x512xf32>
    %c0_3 = arith.constant 0 : index
    %c0_4 = arith.constant 0 : index
    %6 = vector.load %arg10[%c0_3, %c0_4] : memref<4x512xf32, #tpu.memory_space<vmem>>, vector<4x512xf32>
    %c0_5 = arith.constant 0 : index
    %c0_6 = arith.constant 0 : index
    %7 = vector.load %arg11[%c0_5, %c0_6] : memref<4x512xf32, #tpu.memory_space<vmem>>, vector<4x512xf32>
    %cst = arith.constant 8.500000e-01 : f32
    %8 = vector.broadcast %cst : f32 to vector<4x512xf32>
    %9 = arith.mulf %8, %7 : vector<4x512xf32>
    %cst_7 = arith.constant 6.66666651 : f32
    %10 = vector.broadcast %cst_7 : f32 to vector<4x512xf32>
    %11 = arith.mulf %10, %5 : vector<4x512xf32>
    %12 = arith.addf %9, %11 : vector<4x512xf32>
    %cst_8 = arith.constant 0.899999976 : f32
    %13 = vector.broadcast %cst_8 : f32 to vector<4x512xf32>
    %14 = arith.mulf %13, %6 : vector<4x512xf32>
    %cst_9 = arith.constant 1.000000e+01 : f32
    %15 = vector.broadcast %cst_9 : f32 to vector<4x512xf32>
    %16 = arith.mulf %15, %7 : vector<4x512xf32>
    %17 = arith.addf %14, %16 : vector<4x512xf32>
    %c0_10 = arith.constant 0 : index
    %c0_11 = arith.constant 0 : index
    %18 = vector.load %arg12[%c0_10, %c0_11] : memref<8x512xf32, #tpu.memory_space<vmem>>, vector<8x512xf32>
    %cst_12 = arith.constant 6.500000e-01 : f32
    %19 = vector.broadcast %cst_12 : f32 to vector<8x512xf32>
    %20 = arith.mulf %19, %18 : vector<8x512xf32>
    %c0_13 = arith.constant 0 : index
    %c0_14 = arith.constant 0 : index
    %21 = vector.load %arg13[%c0_13, %c0_14] : memref<8x512xf32, #tpu.memory_space<vmem>>, vector<8x512xf32>
    %cst_15 = arith.constant 1.000000e+00 : f32
    %22 = vector.broadcast %cst_15 : f32 to vector<8x512xf32>
    %23 = arith.mulf %22, %21 : vector<8x512xf32>
    %24 = arith.subf %20, %23 : vector<8x512xf32>
    %c0_16 = arith.constant 0 : index
    %c0_17 = arith.constant 0 : index
    %25 = vector.load %arg14[%c0_16, %c0_17] : memref<36x512xf32, #tpu.memory_space<vmem>>, vector<4x512xf32>
    tpu.vector_store %arg14[%c0_16, %c0_17], %17 {strides = array<i32>} : memref<36x512xf32, #tpu.memory_space<vmem>>, vector<4x512xf32>,
    %c511_i32 = arith.constant 511 : i32
    %26 = tpu.dynamic_rotate %17 by %c511_i32 dim 1 : vector<4x512xf32>, i32 -> vector<4x512xf32>
    %c4 = arith.constant 4 : index
    %c0_18 = arith.constant 0 : index
    %27 = vector.load %arg14[%c4, %c0_18] : memref<36x512xf32, #tpu.memory_space<vmem>>, vector<4x512xf32>
    tpu.vector_store %arg14[%c4, %c0_18], %26 {strides = array<i32>} : memref<36x512xf32, #tpu.memory_space<vmem>>, vector<4x512xf32>,
    %c510_i32 = arith.constant 510 : i32
    %28 = tpu.dynamic_rotate %17 by %c510_i32 dim 1 : vector<4x512xf32>, i32 -> vector<4x512xf32>
    %c8 = arith.constant 8 : index
    %c0_19 = arith.constant 0 : index
    %29 = vector.load %arg14[%c8, %c0_19] : memref<36x512xf32, #tpu.memory_space<vmem>>, vector<4x512xf32>
    tpu.vector_store %arg14[%c8, %c0_19], %28 {strides = array<i32>} : memref<36x512xf32, #tpu.memory_space<vmem>>, vector<4x512xf32>,
    %c496_i32 = arith.constant 496 : i32
    %30 = tpu.dynamic_rotate %17 by %c496_i32 dim 1 : vector<4x512xf32>, i32 -> vector<4x512xf32>
    %c12 = arith.constant 12 : index
    %c0_20 = arith.constant 0 : index
    %31 = vector.load %arg14[%c12, %c0_20] : memref<36x512xf32, #tpu.memory_space<vmem>>, vector<4x512xf32>
    tpu.vector_store %arg14[%c12, %c0_20], %30 {strides = array<i32>} : memref<36x512xf32, #tpu.memory_space<vmem>>, vector<4x512xf32>,
    %c495_i32 = arith.constant 495 : i32
    %32 = tpu.dynamic_rotate %17 by %c495_i32 dim 1 : vector<4x512xf32>, i32 -> vector<4x512xf32>
    %c16 = arith.constant 16 : index
    %c0_21 = arith.constant 0 : index
    %33 = vector.load %arg14[%c16, %c0_21] : memref<36x512xf32, #tpu.memory_space<vmem>>, vector<4x512xf32>
    tpu.vector_store %arg14[%c16, %c0_21], %32 {strides = array<i32>} : memref<36x512xf32, #tpu.memory_space<vmem>>, vector<4x512xf32>,
    %c494_i32 = arith.constant 494 : i32
    %34 = tpu.dynamic_rotate %17 by %c494_i32 dim 1 : vector<4x512xf32>, i32 -> vector<4x512xf32>
    %c20 = arith.constant 20 : index
    %c0_22 = arith.constant 0 : index
    %35 = vector.load %arg14[%c20, %c0_22] : memref<36x512xf32, #tpu.memory_space<vmem>>, vector<4x512xf32>
    tpu.vector_store %arg14[%c20, %c0_22], %34 {strides = array<i32>} : memref<36x512xf32, #tpu.memory_space<vmem>>, vector<4x512xf32>,
    %c480_i32 = arith.constant 480 : i32
    %36 = tpu.dynamic_rotate %17 by %c480_i32 dim 1 : vector<4x512xf32>, i32 -> vector<4x512xf32>
    %c24 = arith.constant 24 : index
    %c0_23 = arith.constant 0 : index
    %37 = vector.load %arg14[%c24, %c0_23] : memref<36x512xf32, #tpu.memory_space<vmem>>, vector<4x512xf32>
    tpu.vector_store %arg14[%c24, %c0_23], %36 {strides = array<i32>} : memref<36x512xf32, #tpu.memory_space<vmem>>, vector<4x512xf32>,
    %c479_i32 = arith.constant 479 : i32
    %38 = tpu.dynamic_rotate %17 by %c479_i32 dim 1 : vector<4x512xf32>, i32 -> vector<4x512xf32>
    %c28 = arith.constant 28 : index
    %c0_24 = arith.constant 0 : index
    %39 = vector.load %arg14[%c28, %c0_24] : memref<36x512xf32, #tpu.memory_space<vmem>>, vector<4x512xf32>
    tpu.vector_store %arg14[%c28, %c0_24], %38 {strides = array<i32>} : memref<36x512xf32, #tpu.memory_space<vmem>>, vector<4x512xf32>,
    %c478_i32 = arith.constant 478 : i32
    %40 = tpu.dynamic_rotate %17 by %c478_i32 dim 1 : vector<4x512xf32>, i32 -> vector<4x512xf32>
    %c32 = arith.constant 32 : index
    %c0_25 = arith.constant 0 : index
    %41 = vector.load %arg14[%c32, %c0_25] : memref<36x512xf32, #tpu.memory_space<vmem>>, vector<4x512xf32>
    tpu.vector_store %arg14[%c32, %c0_25], %40 {strides = array<i32>} : memref<36x512xf32, #tpu.memory_space<vmem>>, vector<4x512xf32>,
    %c0_26 = arith.constant 0 : index
    %c0_27 = arith.constant 0 : index
    %42 = vector.load %arg3[%c0_26, %c0_27] : memref<8x36xf32, #tpu.memory_space<vmem>>, vector<8x36xf32>
    %c0_28 = arith.constant 0 : index
    %c0_29 = arith.constant 0 : index
    %43 = vector.load %arg14[%c0_28, %c0_29] : memref<36x512xf32, #tpu.memory_space<vmem>>, vector<36x512xf32>
    %cst_30 = arith.constant dense<0.000000e+00> : vector<8x512xf32>
    %44 = tpu.matmul %42, %43, %cst_30 {dimension_numbers = #tpu.dot_dimension_numbers<[1], [0], [0], [1], [0, 0, 1, 1], [], []>} : vector<8x36xf32>, vector<36x512xf32>, vector<8x512xf32> -> vector<8x512xf32>
    %c0_31 = arith.constant 0 : index
    %c0_32 = arith.constant 0 : index
    %45 = vector.load %arg4[%c0_31, %c0_32] : memref<8x1xf32, #tpu.memory_space<vmem>>, vector<8x1xf32>
    %46 = vector.broadcast %45 : vector<8x1xf32> to vector<8x512xf32>
    %47 = arith.addf %44, %46 : vector<8x512xf32>
    %48 = arith.addf %47, %24 : vector<8x512xf32>
    %cst_33 = arith.constant 0.000000e+00 : f32
    %49 = vector.broadcast %cst_33 : f32 to vector<8x512xf32>
    %50 = arith.cmpf oge, %48, %49 : vector<8x512xf32>
    %51 = arith.extui %50 : vector<8x512xi1> to vector<8x512xi32>
    %52 = arith.sitofp %51 : vector<8x512xi32> to vector<8x512xf32>
    %53 = arith.truncf %52 : vector<8x512xf32> to vector<8x512xbf16>
    %c0_34 = arith.constant 0 : index
    %c0_35 = arith.constant 0 : index
    %c0_36 = arith.constant 0 : index
    %54 = vector.load %arg5[%c0_34, %c0_35, %c0_36] : memref<1x8x512xbf16, #tpu.memory_space<vmem>>, vector<1x8x512xbf16>
    %55 = vector.shape_cast %54 : vector<1x8x512xbf16> to vector<8x512xbf16>
    %56 = vector.shape_cast %53 : vector<8x512xbf16> to vector<1x8x512xbf16>
    tpu.vector_store %arg5[%c0_34, %c0_35, %c0_36], %56 {strides = array<i32>} : memref<1x8x512xbf16, #tpu.memory_space<vmem>>, vector<1x8x512xbf16>,
    %c0_37 = arith.constant 0 : index
    %c0_38 = arith.constant 0 : index
    %c0_39 = arith.constant 0 : index
    %57 = vector.load %arg6[%c0_37, %c0_38, %c0_39] : memref<1x8x512xf32, #tpu.memory_space<vmem>>, vector<1x8x512xf32>
    %58 = vector.shape_cast %57 : vector<1x8x512xf32> to vector<8x512xf32>
    %59 = vector.shape_cast %48 : vector<8x512xf32> to vector<1x8x512xf32>
    tpu.vector_store %arg6[%c0_37, %c0_38, %c0_39], %59 {strides = array<i32>} : memref<1x8x512xf32, #tpu.memory_space<vmem>>, vector<1x8x512xf32>,
    %c0_40 = arith.constant 0 : index
    %c0_41 = arith.constant 0 : index
    %60 = vector.load %arg10[%c0_40, %c0_41] : memref<4x512xf32, #tpu.memory_space<vmem>>, vector<4x512xf32>
    tpu.vector_store %arg10[%c0_40, %c0_41], %17 {strides = array<i32>} : memref<4x512xf32, #tpu.memory_space<vmem>>, vector<4x512xf32>,
    %c0_42 = arith.constant 0 : index
    %c0_43 = arith.constant 0 : index
    %61 = vector.load %arg11[%c0_42, %c0_43] : memref<4x512xf32, #tpu.memory_space<vmem>>, vector<4x512xf32>
    tpu.vector_store %arg11[%c0_42, %c0_43], %12 {strides = array<i32>} : memref<4x512xf32, #tpu.memory_space<vmem>>, vector<4x512xf32>,
    %c0_44 = arith.constant 0 : index
    %c0_45 = arith.constant 0 : index
    %62 = vector.load %arg12[%c0_44, %c0_45] : memref<8x512xf32, #tpu.memory_space<vmem>>, vector<8x512xf32>
    tpu.vector_store %arg12[%c0_44, %c0_45], %24 {strides = array<i32>} : memref<8x512xf32, #tpu.memory_space<vmem>>, vector<8x512xf32>,
    %c0_46 = arith.constant 0 : index
    %c0_47 = arith.constant 0 : index
    %63 = vector.load %arg13[%c0_46, %c0_47] : memref<8x512xf32, #tpu.memory_space<vmem>>, vector<8x512xf32>
    tpu.vector_store %arg13[%c0_46, %c0_47], %52 {strides = array<i32>} : memref<8x512xf32, #tpu.memory_space<vmem>>, vector<8x512xf32>,
    %c7_i32 = arith.constant 7 : i32
    %64 = arith.cmpi eq, %arg1, %c7_i32 : i32
    %65 = arith.extui %64 : i1 to i32
    %c0_i32_48 = arith.constant 0 : i32
    %66 = arith.cmpi ne, %65, %c0_i32_48 : i32
    scf.if %66 {
      %c0_49 = arith.constant 0 : index
      %c0_50 = arith.constant 0 : index
      %67 = vector.load %arg7[%c0_49, %c0_50] : memref<4x512xf32, #tpu.memory_space<vmem>>, vector<4x512xf32>
      tpu.vector_store %arg7[%c0_49, %c0_50], %17 {strides = array<i32>} : memref<4x512xf32, #tpu.memory_space<vmem>>, vector<4x512xf32>,
      %c0_51 = arith.constant 0 : index
      %c0_52 = arith.constant 0 : index
      %68 = vector.load %arg8[%c0_51, %c0_52] : memref<4x512xf32, #tpu.memory_space<vmem>>, vector<4x512xf32>
      tpu.vector_store %arg8[%c0_51, %c0_52], %12 {strides = array<i32>} : memref<4x512xf32, #tpu.memory_space<vmem>>, vector<4x512xf32>,
      %c0_53 = arith.constant 0 : index
      %c0_54 = arith.constant 0 : index
      %69 = vector.load %arg9[%c0_53, %c0_54] : memref<8x512xf32, #tpu.memory_space<vmem>>, vector<8x512xf32>
      tpu.vector_store %arg9[%c0_53, %c0_54], %24 {strides = array<i32>} : memref<8x512xf32, #tpu.memory_space<vmem>>, vector<8x512xf32>,
    } else {
    }
    return
  }
  func.func @transform_0(%arg0: i32, %arg1: i32) -> (i32, i32, i32) {
    %c0_i32 = arith.constant 0 : i32
    %c0_i32_0 = arith.constant 0 : i32
    return %arg1, %c0_i32, %arg0 : i32, i32, i32
  }
  func.func @transform_1(%arg0: i32, %arg1: i32) -> (i32, i32) {
    %c0_i32 = arith.constant 0 : i32
    %c0_i32_0 = arith.constant 0 : i32
    %c0_i32_1 = arith.constant 0 : i32
    return %c0_i32, %c0_i32_0 : i32, i32
  }
  func.func @transform_2(%arg0: i32, %arg1: i32) -> (i32, i32) {
    %c0_i32 = arith.constant 0 : i32
    %c0_i32_0 = arith.constant 0 : i32
    %c0_i32_1 = arith.constant 0 : i32
    return %c0_i32, %c0_i32_0 : i32, i32
  }
  func.func @transform_3(%arg0: i32, %arg1: i32) -> (i32, i32, i32) {
    %c0_i32 = arith.constant 0 : i32
    %c0_i32_0 = arith.constant 0 : i32
    return %arg1, %c0_i32, %arg0 : i32, i32, i32
  }
  func.func @transform_4(%arg0: i32, %arg1: i32) -> (i32, i32, i32) {
    %c0_i32 = arith.constant 0 : i32
    %c0_i32_0 = arith.constant 0 : i32
    return %arg1, %c0_i32, %arg0 : i32, i32, i32
  }
  func.func @transform_5(%arg0: i32, %arg1: i32) -> (i32, i32) {
    %c0_i32 = arith.constant 0 : i32
    %c0_i32_0 = arith.constant 0 : i32
    return %c0_i32, %arg0 : i32, i32
  }
  func.func @transform_6(%arg0: i32, %arg1: i32) -> (i32, i32) {
    %c0_i32 = arith.constant 0 : i32
    %c0_i32_0 = arith.constant 0 : i32
    return %c0_i32, %arg0 : i32, i32
  }
  func.func @transform_7(%arg0: i32, %arg1: i32) -> (i32, i32) {
    %c0_i32 = arith.constant 0 : i32
    %c0_i32_0 = arith.constant 0 : i32
    return %c0_i32, %arg0 : i32, i32
  }
}

</mosaic_0001>

<llo_original>
// kernel: lif_forward_sequence.1
$region0: #{lif_forward_sequence.1}
  #allocation0 [shape = 'u32[]', space=smem, size = 0x4, offset = 0x4, fixed_abs, tag = 'smem constant byte address 0x4 - core index']
  #allocation1 [shape = 'u32[144,128]{1,0:T(1,128)}', space=vmem, size = 0x12000, scoped, tag = 'internal scratch']
  #allocation2 [shape = 'f32[4,512]{1,0:T(4,128)}', space=vmem, size = 0x2000, scoped, tag = 'scratch operand']
  #allocation3 [shape = 'f32[4,512]{1,0:T(4,128)}', space=vmem, size = 0x2000, scoped, tag = 'scratch operand']
  #allocation4 [shape = 'f32[8,512]{1,0:T(8,128)}', space=vmem, size = 0x4000, scoped, tag = 'scratch operand']
  #allocation5 [shape = 'f32[8,512]{1,0:T(8,128)}', space=vmem, size = 0x4000, scoped, tag = 'scratch operand']
  #allocation6 [shape = 'f32[36,512]{1,0:T(8,128)}', space=vmem, size = 0x14000, scoped, tag = 'scratch operand']
  %s0 = inlined_call_operand.vmem [shape: bf16[8,4,512], index: 0, kind: input, shape index: {}]
  %s1 = inlined_call_operand.vmem [shape: f32[8,36], index: 1, kind: input, shape index: {}]
  %s2 = inlined_call_operand.vmem [shape: f32[8,1], index: 2, kind: input, shape index: {}]
  %s3 = inlined_call_operand.vmem [shape: bf16[8,8,512], index: 3, kind: output, shape index: {0}]
  %s4 = inlined_call_operand.vmem [shape: f32[8,8,512], index: 4, kind: output, shape index: {1}]
  %s5 = inlined_call_operand.vmem [shape: f32[4,512], index: 5, kind: output, shape index: {2}]
  %s6 = inlined_call_operand.vmem [shape: f32[4,512], index: 6, kind: output, shape index: {3}]
  %s7 = inlined_call_operand.vmem [shape: f32[8,512], index: 7, kind: output, shape index: {4}]
  %8 = xla_tuple %s3, %s4, %s5, %s6, %s7
  %s9 = sld [smem:[#allocation0]]
  $region85: #{lif_forward_sequence.1} parent=0
    _
  %s11 = ssub.s32 1, %s9
  %s12 = scalar_select 0, %s11, %s9
  loop: start=0, step=1, limit=10
  $region2: #{lif_forward_sequence.1} parent=0 // loop_pre_header
    _
  $region3: #{lif_forward_sequence.1} parent=0 // loop_header
    %s14 = sphi 0, %s18
    %p15 = scmp.ge.s32.totalorder %s14, 10
    %s21 = sphi 0, %s33
    %s22 = sphi 0, %s29
    %s23 = sphi 0, %s21
    %s24 = sphi 0, %s22
    %s25 = sphi 0, %s23
    %s26 = sphi 0, %s24
    %s38 = sphi 0, %s40
    %s41 = sphi 0, %s38
    %s42 = sphi 0, %s41
    %s58 = sphi 0, %s42
    %s62 = sphi 0, %s62
    %s64 = sphi 0, %s62
    %s65 = sphi 0, %s64
    %s79 = sphi 0, %s65
    %s83 = sphi 0, %s83
    %s85 = sphi 0, %s83
    %s86 = sphi 0, %s85
    %s100 = sphi 0, %s86
    %s108 = sphi 0, %s110
    %s111 = sphi 0, %s108
    %s112 = sphi 0, %s111
    %s128 = sphi 0, %s112
    %s136 = sphi 0, %s138
    %s139 = sphi 0, %s136
    %s140 = sphi 0, %s139
    %s156 = sphi 0, %s140
    %s162 = sphi 0, %s164
    %s165 = sphi 0, %s162
    %s166 = sphi 0, %s165
    %s182 = sphi 0, %s166
    %s188 = sphi 0, %s190
    %s191 = sphi 0, %s188
    %s192 = sphi 0, %s191
    %s208 = sphi 0, %s192
    %s214 = sphi 0, %s216
    %s217 = sphi 0, %s214
    %s218 = sphi 0, %s217
    %s234 = sphi 0, %s218
  $region4: #{lif_forward_sequence.1} parent=0 // loop_header_branch
    %17 = sbr.rel (%p15) target = $region8
  $region5: #{lif_forward_sequence.1} parent=0 // loop_body
    %s19 = ssub.s32 %s14, 1
    %s20 = ssub.s32 %s14, 2
    %s27 = sadd.s32 1, %s22
    %p28 = scmp.ge.s32.totalorder %s27, 8
    %s29 = scalar_select %p28, 0, %s27
    %s30 = sadd.s32 1, %s21
    %s31 = scalar_select %p28, %s30, %s21
    %p32 = scmp.ge.s32.totalorder %s31, 1
    %s33 = scalar_select %p32, 0, %s31
    %s34 = ssub.s32 %s22, %s29
    %s35 = ssub.s32 %s21, %s33
    %s36 = sor.u32 %s34, %s35
    %p37 = scmp.eq.s32.totalorder %s36, 0
    %s39 = sadd.s32 %s38, 1
    %s40 = scalar_select %p37, %s38, %s39
    %p43 = pneg %p37
    %p44 = scmp.eq.s32.totalorder %s14, 7
    %p45 = por %p43, %p44
    %p46 = scmp.ne.s32.totalorder %s38, %s41
    %p47 = scmp.eq.s32.totalorder %s14, 0
    %p48 = por %p46, %p47
    %p49 = scmp.ne.s32.totalorder %s38, %s41
    %p50 = scmp.eq.s32.totalorder %s19, 7
    %p51 = por %p49, %p50
    %p52 = scmp.ne.s32.totalorder %s41, %s42
    %p53 = scmp.eq.s32.totalorder %s19, 0
    %p54 = por %p52, %p53
    %p55 = scmp.ne.s32.totalorder %s41, %s42
    %p56 = scmp.eq.s32.totalorder %s20, 7
    %p57 = por %p55, %p56
    %p59 = scmp.ne.s32.totalorder %s42, %s58
    %p60 = scmp.eq.s32.totalorder %s20, 0
    %p61 = por %p59, %p60
    %s63 = sadd.s32 %s62, 1
    %p66 = scmp.eq.s32.totalorder %s14, 7
    %p67 = scmp.ne.s32.totalorder %s62, %s64
    %p68 = scmp.eq.s32.totalorder %s14, 0
    %p69 = por %p67, %p68
    %p70 = scmp.ne.s32.totalorder %s62, %s64
    %p71 = scmp.eq.s32.totalorder %s19, 7
    %p72 = por %p70, %p71
    %p73 = scmp.ne.s32.totalorder %s64, %s65
    %p74 = scmp.eq.s32.totalorder %s19, 0
    %p75 = por %p73, %p74
    %p76 = scmp.ne.s32.totalorder %s64, %s65
    %p77 = scmp.eq.s32.totalorder %s20, 7
    %p78 = por %p76, %p77
    %p80 = scmp.ne.s32.totalorder %s65, %s79
    %p81 = scmp.eq.s32.totalorder %s20, 0
    %p82 = por %p80, %p81
    %s84 = sadd.s32 %s83, 1
    %p87 = scmp.eq.s32.totalorder %s14, 7
    %p88 = scmp.ne.s32.totalorder %s83, %s85
    %p89 = scmp.eq.s32.totalorder %s14, 0
    %p90 = por %p88, %p89
    %p91 = scmp.ne.s32.totalorder %s83, %s85
    %p92 = scmp.eq.s32.totalorder %s19, 7
    %p93 = por %p91, %p92
    %p94 = scmp.ne.s32.totalorder %s85, %s86
    %p95 = scmp.eq.s32.totalorder %s19, 0
    %p96 = por %p94, %p95
    %p97 = scmp.ne.s32.totalorder %s85, %s86
    %p98 = scmp.eq.s32.totalorder %s20, 7
    %p99 = por %p97, %p98
    %p101 = scmp.ne.s32.totalorder %s86, %s100
    %p102 = scmp.eq.s32.totalorder %s20, 0
    %p103 = por %p101, %p102
    %s104 = ssub.s32 %s22, %s29
    %s105 = ssub.s32 %s21, %s33
    %s106 = sor.u32 %s104, %s105
    %p107 = scmp.eq.s32.totalorder %s106, 0
    %s109 = sadd.s32 %s108, 1
    %s110 = scalar_select %p107, %s108, %s109
    %p113 = pneg %p107
    %p114 = scmp.eq.s32.totalorder %s14, 7
    %p115 = por %p113, %p114
    %p116 = scmp.ne.s32.totalorder %s108, %s111
    %p117 = scmp.eq.s32.totalorder %s14, 0
    %p118 = por %p116, %p117
    %p119 = scmp.ne.s32.totalorder %s108, %s111
    %p120 = scmp.eq.s32.totalorder %s19, 7
    %p121 = por %p119, %p120
    %p122 = scmp.ne.s32.totalorder %s111, %s112
    %p123 = scmp.eq.s32.totalorder %s19, 0
    %p124 = por %p122, %p123
    %p125 = scmp.ne.s32.totalorder %s111, %s112
    %p126 = scmp.eq.s32.totalorder %s20, 7
    %p127 = por %p125, %p126
    %p129 = scmp.ne.s32.totalorder %s112, %s128
    %p130 = scmp.eq.s32.totalorder %s20, 0
    %p131 = por %p129, %p130
    %s132 = ssub.s32 %s22, %s29
    %s133 = ssub.s32 %s21, %s33
    %s134 = sor.u32 %s132, %s133
    %p135 = scmp.eq.s32.totalorder %s134, 0
    %s137 = sadd.s32 %s136, 1
    %s138 = scalar_select %p135, %s136, %s137
    %p141 = pneg %p135
    %p142 = scmp.eq.s32.totalorder %s14, 7
    %p143 = por %p141, %p142
    %p144 = scmp.ne.s32.totalorder %s136, %s139
    %p145 = scmp.eq.s32.totalorder %s14, 0
    %p146 = por %p144, %p145
    %p147 = scmp.ne.s32.totalorder %s136, %s139
    %p148 = scmp.eq.s32.totalorder %s19, 7
    %p149 = por %p147, %p148
    %p150 = scmp.ne.s32.totalorder %s139, %s140
    %p151 = scmp.eq.s32.totalorder %s19, 0
    %p152 = por %p150, %p151
    %p153 = scmp.ne.s32.totalorder %s139, %s140
    %p154 = scmp.eq.s32.totalorder %s20, 7
    %p155 = por %p153, %p154
    %p157 = scmp.ne.s32.totalorder %s140, %s156
    %p158 = scmp.eq.s32.totalorder %s20, 0
    %p159 = por %p157, %p158
    %s160 = ssub.s32 %s21, %s33
    %p161 = scmp.eq.s32.totalorder %s160, 0
    %s163 = sadd.s32 %s162, 1
    %s164 = scalar_select %p161, %s162, %s163
    %p167 = pneg %p161
    %p168 = scmp.eq.s32.totalorder %s14, 7
    %p169 = por %p167, %p168
    %p170 = scmp.ne.s32.totalorder %s162, %s165
    %p171 = scmp.eq.s32.totalorder %s14, 0
    %p172 = por %p170, %p171
    %p173 = scmp.ne.s32.totalorder %s162, %s165
    %p174 = scmp.eq.s32.totalorder %s19, 7
    %p175 = por %p173, %p174
    %p176 = scmp.ne.s32.totalorder %s165, %s166
    %p177 = scmp.eq.s32.totalorder %s19, 0
    %p178 = por %p176, %p177
    %p179 = scmp.ne.s32.totalorder %s165, %s166
    %p180 = scmp.eq.s32.totalorder %s20, 7
    %p181 = por %p179, %p180
    %p183 = scmp.ne.s32.totalorder %s166, %s182
    %p184 = scmp.eq.s32.totalorder %s20, 0
    %p185 = por %p183, %p184
    %s186 = ssub.s32 %s21, %s33
    %p187 = scmp.eq.s32.totalorder %s186, 0
    %s189 = sadd.s32 %s188, 1
    %s190 = scalar_select %p187, %s188, %s189
    %p193 = pneg %p187
    %p194 = scmp.eq.s32.totalorder %s14, 7
    %p195 = por %p193, %p194
    %p196 = scmp.ne.s32.totalorder %s188, %s191
    %p197 = scmp.eq.s32.totalorder %s14, 0
    %p198 = por %p196, %p197
    %p199 = scmp.ne.s32.totalorder %s188, %s191
    %p200 = scmp.eq.s32.totalorder %s19, 7
    %p201 = por %p199, %p200
    %p202 = scmp.ne.s32.totalorder %s191, %s192
    %p203 = scmp.eq.s32.totalorder %s19, 0
    %p204 = por %p202, %p203
    %p205 = scmp.ne.s32.totalorder %s191, %s192
    %p206 = scmp.eq.s32.totalorder %s20, 7
    %p207 = por %p205, %p206
    %p209 = scmp.ne.s32.totalorder %s192, %s208
    %p210 = scmp.eq.s32.totalorder %s20, 0
    %p211 = por %p209, %p210
    %s212 = ssub.s32 %s21, %s33
    %p213 = scmp.eq.s32.totalorder %s212, 0
    %s215 = sadd.s32 %s214, 1
    %s216 = scalar_select %p213, %s214, %s215
    %p219 = pneg %p213
    %p220 = scmp.eq.s32.totalorder %s14, 7
    %p221 = por %p219, %p220
    %p222 = scmp.ne.s32.totalorder %s214, %s217
    %p223 = scmp.eq.s32.totalorder %s14, 0
    %p224 = por %p222, %p223
    %p225 = scmp.ne.s32.totalorder %s214, %s217
    %p226 = scmp.eq.s32.totalorder %s19, 7
    %p227 = por %p225, %p226
    %p228 = scmp.ne.s32.totalorder %s217, %s218
    %p229 = scmp.eq.s32.totalorder %s19, 0
    %p230 = por %p228, %p229
    %p231 = scmp.ne.s32.totalorder %s217, %s218
    %p232 = scmp.eq.s32.totalorder %s20, 7
    %p233 = por %p231, %p232
    %p235 = scmp.ne.s32.totalorder %s218, %s234
    %p236 = scmp.eq.s32.totalorder %s20, 0
    %p237 = por %p235, %p236
    %p238 = scmp.le.s32.totalorder 1, %s14
    %p239 = scmp.lt.s32.totalorder %s14, 9
    %p240 = pnand %p238, %p239
    %p241 = pneg %p240
    // Predicated region
    $region9: #{lif_forward_sequence.1} parent=5 // pred_check
      _
    $region10: #{lif_forward_sequence.1} parent=5 // pred_check_branch
      %243 = sbr.rel (%p240) target = $region12
    $region11: #{lif_forward_sequence.1} parent=5 // pred_region
      %s244 = ssub.s32 %s14, 1
      // Predicated region
      $region13: #{lif_forward_sequence.1} parent=11 // pred_check
        %p245 = pneg %p75
      $region14: #{lif_forward_sequence.1} parent=11 // pred_check_branch
        %247 = sbr.rel (%p245) target = $region16
      $region15: #{lif_forward_sequence.1} parent=11 // pred_region
        _
      $region16: #{lif_forward_sequence.1} parent=11 // pred_fallthru
        _
      // Predicated region
      $region17: #{lif_forward_sequence.1} parent=11 // pred_check
        %p248 = pneg %p96
      $region18: #{lif_forward_sequence.1} parent=11 // pred_check_branch
        %250 = sbr.rel (%p248) target = $region20
      $region19: #{lif_forward_sequence.1} parent=11 // pred_region
        _
      $region20: #{lif_forward_sequence.1} parent=11 // pred_fallthru
        _
    $region12: #{lif_forward_sequence.1} parent=5 // pred_fallthru
      _
    %p251 = scmp.lt.s32.totalorder %s14, 8
    // Predicated region
    $region21: #{lif_forward_sequence.1} parent=5 // pred_check
      %p252 = pneg %p251
    $region22: #{lif_forward_sequence.1} parent=5 // pred_check_branch
      %254 = sbr.rel (%p252) target = $region24
    $region23: #{lif_forward_sequence.1} parent=5 // pred_region
      // Predicated region
      $region25: #{lif_forward_sequence.1} parent=23 // pred_check
        %p255 = pneg %p48
      $region26: #{lif_forward_sequence.1} parent=23 // pred_check_branch
        %257 = sbr.rel (%p255) target = $region28
      $region27: #{lif_forward_sequence.1} parent=23 // pred_region
        %s258 = smul.u32 4, %s21
        %p259 = scmp.lt.s32.totalorder %s22, 7
        %s260 = scalar_select %p259, %s22, 7
        %p261 = scmp.lt.s32.totalorder %s258, 3
        %s262 = scalar_select %p261, %s258, 3
        %s263 = smul.addr %s260, 4
        %s264 = sadd.s32 %s262, %s263
        %s265 = smul.addr %s264, 2
        %s266 = scalar_lea.vmem %s0, %s265
        %s267 = smul.u32 4, %s21
      $region28: #{lif_forward_sequence.1} parent=23 // pred_fallthru
        _
    $region24: #{lif_forward_sequence.1} parent=5 // pred_fallthru
      _
    %p268 = scmp.le.s32.totalorder 1, %s14
    %p269 = scmp.lt.s32.totalorder %s14, 9
    %p270 = pnand %p268, %p269
    %p271 = pneg %p270
    // Predicated region
    $region29: #{lif_forward_sequence.1} parent=5 // pred_check
      _
    $region30: #{lif_forward_sequence.1} parent=5 // pred_check_branch
      %273 = sbr.rel (%p270) target = $region32
    $region31: #{lif_forward_sequence.1} parent=5 // pred_region
      %s274 = ssub.s32 %s14, 1
      %s275 = smul.u32 4, %s23
      %p276 = scmp.lt.s32.totalorder %s24, 7
      %s277 = scalar_select %p276, %s24, 7
      %p278 = scmp.lt.s32.totalorder %s275, 3
      %s279 = scalar_select %p278, %s275, 3
      %s280 = smul.addr %s277, 4
      %s281 = sadd.s32 %s279, %s280
      %s282 = smul.addr %s281, 2
      %s283 = scalar_lea.vmem %s0, %s282
      %p284 = pneg %p54
      %p285 = pneg %p51
      %p286 = pneg %p75
      %p287 = pneg %p72
      %p288 = pneg %p96
      %p289 = pneg %p93
      %p290 = pneg %p124
      %p291 = pneg %p121
      %s292 = smul.u32 4, %s23
      %p293 = scmp.lt.s32.totalorder %s24, 7
      %s294 = scalar_select %p293, %s24, 7
      %p295 = scmp.lt.s32.totalorder %s292, 3
      %s296 = scalar_select %p295, %s292, 3
      %s297 = smul.addr %s294, 4
      %s298 = sadd.s32 %s296, %s297
      %s299 = smul.addr %s298, 4
      %s300 = scalar_lea.vmem %s3, %s299
      %p301 = pneg %p152
      %p302 = pneg %p149
      %s303 = smul.u32 4, %s23
      %p304 = scmp.lt.s32.totalorder %s24, 7
      %s305 = scalar_select %p304, %s24, 7
      %p306 = scmp.lt.s32.totalorder %s303, 3
      %s307 = scalar_select %p306, %s303, 3
      %s308 = smul.addr %s305, 4
      %s309 = sadd.s32 %s307, %s308
      %s310 = smul.addr %s309, 8
      %s311 = scalar_lea.vmem %s4, %s310
      %p312 = pneg %p178
      %p313 = pneg %p175
      %s314 = smul.u32 4, %s23
      %p315 = scmp.lt.s32.totalorder %s314, 3
      %s316 = scalar_select %p315, %s314, 3
      %s317 = smul.addr %s316, 4
      %s318 = scalar_lea.vmem %s5, %s317
      %p319 = pneg %p204
      %p320 = pneg %p201
      %s321 = smul.u32 4, %s23
      %p322 = scmp.lt.s32.totalorder %s321, 3
      %s323 = scalar_select %p322, %s321, 3
      %s324 = smul.addr %s323, 4
      %s325 = scalar_lea.vmem %s6, %s324
      %p326 = pneg %p230
      %p327 = pneg %p227
      %s328 = smul.u32 4, %s23
      %p329 = scmp.lt.s32.totalorder %s328, 3
      %s330 = scalar_select %p329, %s328, 3
      %s331 = smul.addr %s330, 8
      %s332 = scalar_lea.vmem %s7, %s331
      %s333 = smul.u32 4, %s23
      %p334 = scmp.lt.s32.totalorder %s24, 7
      %s335 = scalar_select %p334, %s24, 7
      %p336 = scmp.lt.s32.totalorder %s333, 3
      %s337 = scalar_select %p336, %s333, 3
      %s338 = smul.addr %s335, 4
      %s339 = sadd.s32 %s337, %s338
      %s340 = smul.addr %s339, 2
      %s341 = scalar_lea.vmem %s0, %s340
      %s342 = smul.u32 4, %s23
      %s343 = smul.u32 4, %s23
      %p344 = scmp.lt.s32.totalorder %s24, 7
      %s345 = scalar_select %p344, %s24, 7
      %p346 = scmp.lt.s32.totalorder %s343, 3
      %s347 = scalar_select %p346, %s343, 3
      %s348 = smul.addr %s345, 4
      %s349 = sadd.s32 %s347, %s348
      %s350 = smul.addr %s349, 4
      %s351 = scalar_lea.vmem %s3, %s350
      %s352 = smul.u32 4, %s23
      %s353 = smul.u32 4, %s23
      %p354 = scmp.lt.s32.totalorder %s24, 7
      %s355 = scalar_select %p354, %s24, 7
      %p356 = scmp.lt.s32.totalorder %s353, 3
      %s357 = scalar_select %p356, %s353, 3
      %s358 = smul.addr %s355, 4
      %s359 = sadd.s32 %s357, %s358
      %s360 = smul.addr %s359, 8
      %s361 = scalar_lea.vmem %s4, %s360
      %s362 = smul.u32 4, %s23
      %s363 = smul.u32 4, %s23
      %p364 = scmp.lt.s32.totalorder %s363, 3
      %s365 = scalar_select %p364, %s363, 3
      %s366 = smul.addr %s365, 4
      %s367 = scalar_lea.vmem %s5, %s366
      %s368 = smul.u32 4, %s23
      %s369 = smul.u32 4, %s23
      %p370 = scmp.lt.s32.totalorder %s369, 3
      %s371 = scalar_select %p370, %s369, 3
      %s372 = smul.addr %s371, 4
      %s373 = scalar_lea.vmem %s6, %s372
      %s374 = smul.u32 4, %s23
      %s375 = smul.u32 4, %s23
      %p376 = scmp.lt.s32.totalorder %s375, 3
      %s377 = scalar_select %p376, %s375, 3
      %s378 = smul.addr %s377, 8
      %s379 = scalar_lea.vmem %s7, %s378
      %s380 = smul.u32 4, %s23
      %p381 = scmp.eq.s32.totalorder %s24, 0
      // Predicated region
      $region33: #{lif_forward_sequence.1} parent=31 // pred_check
        %p382 = pneg %p381
      $region34: #{lif_forward_sequence.1} parent=31 // pred_check_branch
        %384 = sbr.rel (%p382) target = $region36
      $region35: #{lif_forward_sequence.1} parent=31 // pred_region
        %385 = vst [vmem:[#allocation2] sm:$0xff] 0.0
        %386 = vst [vmem:[#allocation2 + $0x8] sm:$0xff] 0.0
        %387 = vst [vmem:[#allocation3] sm:$0xff] 0.0
        %388 = vst [vmem:[#allocation3 + $0x8] sm:$0xff] 0.0
        %389 = vst [vmem:[#allocation4] sm:$0xff] 0.0
        %390 = vst [vmem:[#allocation4 + $0x8] sm:$0xff] 0.0
        %391 = vst [vmem:[#allocation4 + $0x10] sm:$0xff] 0.0
        %392 = vst [vmem:[#allocation4 + $0x18] sm:$0xff] 0.0
        %393 = vst [vmem:[#allocation5] sm:$0xff] 0.0
        %394 = vst [vmem:[#allocation5 + $0x8] sm:$0xff] 0.0
        %395 = vst [vmem:[#allocation5 + $0x10] sm:$0xff] 0.0
        %396 = vst [vmem:[#allocation5 + $0x18] sm:$0xff] 0.0
      $region36: #{lif_forward_sequence.1} parent=31 // pred_fallthru
        _
      %v397 = vld [vmem:[%s341] sm:$0xff]
      %v398 = vunpack.c.l.bf16 %v397
      %v399 = vunpack.c.h.bf16 %v397
      %v400 = vld [vmem:[#allocation2] sm:$0xff]
      %v401 = vld [vmem:[#allocation2 + $0x8] sm:$0xff]
      %v402 = vld [vmem:[#allocation3] sm:$0xff]
      %v403 = vld [vmem:[#allocation3 + $0x8] sm:$0xff]
      %v404 = vmul.f32 %v402, 0.85
      %v405 = vmul.f32 %v403, 0.85
      %v406 = vmul.f32 %v398, 6.6666665
      %v407 = vmul.f32 %v399, 6.6666665
      %v408 = vadd.f32 %v404, %v406
      %v409 = vadd.f32 %v405, %v407
      %v410 = vmul.f32 %v400, 0.9
      %v411 = vmul.f32 %v401, 0.9
      %v412 = vmul.f32 %v402, 10.0
      %v413 = vmul.f32 %v403, 10.0
      %v414 = vadd.f32 %v410, %v412
      %v415 = vadd.f32 %v411, %v413
      %v416 = vld [vmem:[#allocation4] sm:$0xff]
      %v417 = vld [vmem:[#allocation4 + $0x8] sm:$0xff]
      %v418 = vld [vmem:[#allocation4 + $0x10] sm:$0xff]
      %v419 = vld [vmem:[#allocation4 + $0x18] sm:$0xff]
      %v420 = vmul.f32 %v416, 0.65
      %v421 = vmul.f32 %v417, 0.65
      %v422 = vmul.f32 %v418, 0.65
      %v423 = vmul.f32 %v419, 0.65
      %v424 = vld [vmem:[#allocation5] sm:$0xff]
      %v425 = vld [vmem:[#allocation5 + $0x8] sm:$0xff]
      %v426 = vld [vmem:[#allocation5 + $0x10] sm:$0xff]
      %v427 = vld [vmem:[#allocation5 + $0x18] sm:$0xff]
      %v428 = vsub.f32 %v420, %v424
      %v429 = vsub.f32 %v421, %v425
      %v430 = vsub.f32 %v422, %v426
      %v431 = vsub.f32 %v423, %v427
      %v434 = vcombine.high %v414, %v414
      %v435 = vcombine.high %v415, %v415
      %438 = vst [vmem:[#allocation6] sm:$0xf] %v414
      %439 = vst [vmem:[#allocation6 + $0x8] sm:$0xf] %v434
      %440 = vst [vmem:[#allocation6 + $0x10] sm:$0xf] %v415
      %441 = vst [vmem:[#allocation6 + $0x18] sm:$0xf] %v435
      %442 = vrot.lane.b32.xlu0 %v414, 127
      %v443 = vpop.permute.xlu0 %442
      %444 = vrot.lane.b32.xlu0 %v434, 127
      %v445 = vpop.permute.xlu0 %444
      %446 = vrot.lane.b32.xlu0 %v415, 127
      %v447 = vpop.permute.xlu0 %446
      %448 = vrot.lane.b32.xlu0 %v435, 127
      %v449 = vpop.permute.xlu0 %448
      %v450 = vlaneseq
      %v451 = vand.u32 %v450, 127
      %vm452 = vcmp.lt.s32.totalorder %v451, 127
      %v453 = vsel %vm452, %v447, %v449
      %v454 = vsel %vm452, %v445, %v447
      %v455 = vsel %vm452, %v443, %v445
      %v456 = vsel %vm452, %v449, %v443
      %v461 = vrot.slane %v455, 4
      %v462 = vrot.slane %v454, 4
      %v463 = vrot.slane %v453, 4
      %v464 = vrot.slane %v456, 4
      %469 = vst [vmem:[#allocation6] sm:$0xf0] %v461
      %470 = vst [vmem:[#allocation6 + $0x8] sm:$0xf0] %v462
      %471 = vst [vmem:[#allocation6 + $0x10] sm:$0xf0] %v463
      %472 = vst [vmem:[#allocation6 + $0x18] sm:$0xf0] %v464
      %473 = vrot.lane.b32.xlu0 %v414, 126
      %v474 = vpop.permute.xlu0 %473
      %475 = vrot.lane.b32.xlu0 %v434, 126
      %v476 = vpop.permute.xlu0 %475
      %477 = vrot.lane.b32.xlu0 %v415, 126
      %v478 = vpop.permute.xlu0 %477
      %479 = vrot.lane.b32.xlu0 %v435, 126
      %v480 = vpop.permute.xlu0 %479
      %vm481 = vcmp.lt.s32.totalorder %v451, 126
      %v482 = vsel %vm481, %v478, %v480
      %v483 = vsel %vm481, %v476, %v478
      %v484 = vsel %vm481, %v474, %v476
      %v485 = vsel %vm481, %v480, %v474
      %486 = vst [vmem:[#allocation6 + $0x20] sm:$0xf] %v484
      %487 = vst [vmem:[#allocation6 + $0x28] sm:$0xf] %v483
      %488 = vst [vmem:[#allocation6 + $0x30] sm:$0xf] %v482
      %489 = vst [vmem:[#allocation6 + $0x38] sm:$0xf] %v485
      %490 = vrot.lane.b32.xlu0 %v414, 112
      %v491 = vpop.permute.xlu0 %490
      %492 = vrot.lane.b32.xlu0 %v434, 112
      %v493 = vpop.permute.xlu0 %492
      %494 = vrot.lane.b32.xlu0 %v415, 112
      %v495 = vpop.permute.xlu0 %494
      %496 = vrot.lane.b32.xlu0 %v435, 112
      %v497 = vpop.permute.xlu0 %496
      %vm498 = vcmp.lt.s32.totalorder %v451, 112
      %v499 = vsel %vm498, %v495, %v497
      %v500 = vsel %vm498, %v493, %v495
      %v501 = vsel %vm498, %v491, %v493
      %v502 = vsel %vm498, %v497, %v491
      %v507 = vrot.slane %v501, 4
      %v508 = vrot.slane %v500, 4
      %v509 = vrot.slane %v499, 4
      %v510 = vrot.slane %v502, 4
      %515 = vst [vmem:[#allocation6 + $0x20] sm:$0xf0] %v507
      %516 = vst [vmem:[#allocation6 + $0x28] sm:$0xf0] %v508
      %517 = vst [vmem:[#allocation6 + $0x30] sm:$0xf0] %v509
      %518 = vst [vmem:[#allocation6 + $0x38] sm:$0xf0] %v510
      %519 = vrot.lane.b32.xlu0 %v414, 111
      %v520 = vpop.permute.xlu0 %519
      %521 = vrot.lane.b32.xlu0 %v434, 111
      %v522 = vpop.permute.xlu0 %521
      %523 = vrot.lane.b32.xlu0 %v415, 111
      %v524 = vpop.permute.xlu0 %523
      %525 = vrot.lane.b32.xlu0 %v435, 111
      %v526 = vpop.permute.xlu0 %525
      %vm527 = vcmp.lt.s32.totalorder %v451, 111
      %v528 = vsel %vm527, %v524, %v526
      %v529 = vsel %vm527, %v522, %v524
      %v530 = vsel %vm527, %v520, %v522
      %v531 = vsel %vm527, %v526, %v520
      %532 = vst [vmem:[#allocation6 + $0x40] sm:$0xf] %v530
      %533 = vst [vmem:[#allocation6 + $0x48] sm:$0xf] %v529
      %534 = vst [vmem:[#allocation6 + $0x50] sm:$0xf] %v528
      %535 = vst [vmem:[#allocation6 + $0x58] sm:$0xf] %v531
      %536 = vrot.lane.b32.xlu0 %v414, 110
      %v537 = vpop.permute.xlu0 %536
      %538 = vrot.lane.b32.xlu0 %v434, 110
      %v539 = vpop.permute.xlu0 %538
      %540 = vrot.lane.b32.xlu0 %v415, 110
      %v541 = vpop.permute.xlu0 %540
      %542 = vrot.lane.b32.xlu0 %v435, 110
      %v543 = vpop.permute.xlu0 %542
      %vm544 = vcmp.lt.s32.totalorder %v451, 110
      %v545 = vsel %vm544, %v541, %v543
      %v546 = vsel %vm544, %v539, %v541
      %v547 = vsel %vm544, %v537, %v539
      %v548 = vsel %vm544, %v543, %v537
      %v553 = vrot.slane %v547, 4
      %v554 = vrot.slane %v546, 4
      %v555 = vrot.slane %v545, 4
      %v556 = vrot.slane %v548, 4
      %561 = vst [vmem:[#allocation6 + $0x40] sm:$0xf0] %v553
      %562 = vst [vmem:[#allocation6 + $0x48] sm:$0xf0] %v554
      %563 = vst [vmem:[#allocation6 + $0x50] sm:$0xf0] %v555
      %564 = vst [vmem:[#allocation6 + $0x58] sm:$0xf0] %v556
      %565 = vrot.lane.b32.xlu0 %v414, 96
      %v566 = vpop.permute.xlu0 %565
      %567 = vrot.lane.b32.xlu0 %v434, 96
      %v568 = vpop.permute.xlu0 %567
      %569 = vrot.lane.b32.xlu0 %v415, 96
      %v570 = vpop.permute.xlu0 %569
      %571 = vrot.lane.b32.xlu0 %v435, 96
      %v572 = vpop.permute.xlu0 %571
      %vm573 = vcmp.lt.s32.totalorder %v451, 96
      %v574 = vsel %vm573, %v570, %v572
      %v575 = vsel %vm573, %v568, %v570
      %v576 = vsel %vm573, %v566, %v568
      %v577 = vsel %vm573, %v572, %v566
      %578 = vst [vmem:[#allocation6 + $0x60] sm:$0xf] %v576
      %579 = vst [vmem:[#allocation6 + $0x68] sm:$0xf] %v575
      %580 = vst [vmem:[#allocation6 + $0x70] sm:$0xf] %v574
      %581 = vst [vmem:[#allocation6 + $0x78] sm:$0xf] %v577
      %582 = vrot.lane.b32.xlu0 %v414, 95
      %v583 = vpop.permute.xlu0 %582
      %584 = vrot.lane.b32.xlu0 %v434, 95
      %v585 = vpop.permute.xlu0 %584
      %586 = vrot.lane.b32.xlu0 %v415, 95
      %v587 = vpop.permute.xlu0 %586
      %588 = vrot.lane.b32.xlu0 %v435, 95
      %v589 = vpop.permute.xlu0 %588
      %vm590 = vcmp.lt.s32.totalorder %v451, 95
      %v591 = vsel %vm590, %v587, %v589
      %v592 = vsel %vm590, %v585, %v587
      %v593 = vsel %vm590, %v583, %v585
      %v594 = vsel %vm590, %v589, %v583
      %v599 = vrot.slane %v593, 4
      %v600 = vrot.slane %v592, 4
      %v601 = vrot.slane %v591, 4
      %v602 = vrot.slane %v594, 4
      %607 = vst [vmem:[#allocation6 + $0x60] sm:$0xf0] %v599
      %608 = vst [vmem:[#allocation6 + $0x68] sm:$0xf0] %v600
      %609 = vst [vmem:[#allocation6 + $0x70] sm:$0xf0] %v601
      %610 = vst [vmem:[#allocation6 + $0x78] sm:$0xf0] %v602
      %611 = vrot.lane.b32.xlu0 %v414, 94
      %v612 = vpop.permute.xlu0 %611
      %613 = vrot.lane.b32.xlu0 %v434, 94
      %v614 = vpop.permute.xlu0 %613
      %615 = vrot.lane.b32.xlu0 %v415, 94
      %v616 = vpop.permute.xlu0 %615
      %617 = vrot.lane.b32.xlu0 %v435, 94
      %v618 = vpop.permute.xlu0 %617
      %vm619 = vcmp.lt.s32.totalorder %v451, 94
      %v620 = vsel %vm619, %v616, %v618
      %v621 = vsel %vm619, %v614, %v616
      %v622 = vsel %vm619, %v612, %v614
      %v623 = vsel %vm619, %v618, %v612
      %624 = vst [vmem:[#allocation6 + $0x80] sm:$0xf] %v622
      %625 = vst [vmem:[#allocation6 + $0x88] sm:$0xf] %v621
      %626 = vst [vmem:[#allocation6 + $0x90] sm:$0xf] %v620
      %627 = vst [vmem:[#allocation6 + $0x98] sm:$0xf] %v623
      %v628 = vld [vmem:[%s1] sm:$0xff]
      %v629 = vld [vmem:[#allocation6] sm:$0xff]
      %v630 = vld [vmem:[#allocation6 + $0x8] sm:$0xff]
      %v631 = vld [vmem:[#allocation6 + $0x10] sm:$0xff]
      %v632 = vld [vmem:[#allocation6 + $0x18] sm:$0xff]
      %v633 = vld [vmem:[#allocation6 + $0x20] sm:$0xff]
      %v634 = vld [vmem:[#allocation6 + $0x28] sm:$0xff]
      %v635 = vld [vmem:[#allocation6 + $0x30] sm:$0xff]
      %v636 = vld [vmem:[#allocation6 + $0x38] sm:$0xff]
      %v637 = vld [vmem:[#allocation6 + $0x40] sm:$0xff]
      %v638 = vld [vmem:[#allocation6 + $0x48] sm:$0xff]
      %v639 = vld [vmem:[#allocation6 + $0x50] sm:$0xff]
      %v640 = vld [vmem:[#allocation6 + $0x58] sm:$0xff]
      %v641 = vld [vmem:[#allocation6 + $0x60] sm:$0xff]
      %v642 = vld [vmem:[#allocation6 + $0x68] sm:$0xff]
      %v643 = vld [vmem:[#allocation6 + $0x70] sm:$0xff]
      %v644 = vld [vmem:[#allocation6 + $0x78] sm:$0xff]
      %v645 = vld [vmem:[#allocation6 + $0x80] sm:$0xf]
      %v646 = vld [vmem:[#allocation6 + $0x88] sm:$0xf]
      %v647 = vld [vmem:[#allocation6 + $0x90] sm:$0xf]
      %v648 = vld [vmem:[#allocation6 + $0x98] sm:$0xf]
      %v649 = vld [vmem:[%s2] sm:$0xff]
      %651 = vset.pattern.permute.xlu0 0
      %652 = vperm.xlu0 %651, %v649
      %v653 = vpop.permute.xlu0 %652
      %vm655 = vcmask 293888
      %v657 = vsel %vm655, %v628, 0
      %vm659 = vcmask 1043456
      %v661 = vsel %vm659, %v645, 0
      %v664 = vsel %vm659, %v646, 0
      %v667 = vsel %vm659, %v647, 0
      %v670 = vsel %vm659, %v648, 0
      %672 = vmatprep.subr.mxu0 %v630
      %673 = vmatpush1.msra.mxu0 %v629
      %674 = vmatprep.subr.mxu0 %v634
      %675 = vmatpush1.msra.mxu0 %v633
      %676 = vmatprep.subr.mxu0 %v638
      %677 = vmatpush1.msra.mxu0 %v637
      %678 = vmatprep.subr.mxu0 %v642
      %679 = vmatpush1.msra.mxu0 %v641
      %680 = vmatprep.subr.mxu0 %v664
      %681 = vmatpush1.msra.mxu0 %v661
      %682 = vmatprep.subr.mxu0 0.0
      %683 = vmatpush1.msra.mxu0 0.0
      %684 = vmatprep.subr.mxu0 0.0
      %685 = vmatpush1.msra.mxu0 0.0
      %686 = vmatprep.subr.mxu0 0.0
      %687 = vmatpush1.msra.mxu0 0.0
      %688 = vmatprep.subr.mxu0 0.0
      %689 = vmatpush1.msra.mxu0 0.0
      %690 = vmatprep.subr.mxu0 0.0
      %691 = vmatpush1.msra.mxu0 0.0
      %692 = vmatprep.subr.mxu0 0.0
      %693 = vmatpush1.msra.mxu0 0.0
      %694 = vmatprep.subr.mxu0 0.0
      %695 = vmatpush1.msra.mxu0 0.0
      %696 = vmatprep.subr.mxu0 0.0
      %697 = vmatpush1.msra.mxu0 0.0
      %698 = vmatprep.subr.mxu0 0.0
      %699 = vmatpush1.msra.mxu0 0.0
      %700 = vmatprep.subr.mxu0 0.0
      %701 = vmatpush1.msra.mxu0 0.0
      %702 = vmatprep.subr.mxu0 0.0
      %703 = vmatpush1.msra.mxu0 0.0
      %704 = vmatprep.subr.mxu0 0.0
      %705 = vmatpush1.msra.mxu0 0.0
      %706 = vmatprep.subr.mxu0 0.0
      %707 = vmatpush1.msra.mxu0 0.0
      %708 = vmatprep.subr.mxu0 0.0
      %709 = vmatpush1.msra.mxu0 0.0
      %710 = vmatprep.subr.mxu0 0.0
      %711 = vmatpush1.msra.mxu0 0.0
      %712 = vmatprep.subr.mxu0 0.0
      %713 = vmatpush1.msra.mxu0 0.0
      %714 = vmatprep.subr.mxu0 0.0
      %715 = vmatpush1.msra.mxu0 0.0
      %716 = vmatprep.subr.mxu0 0.0
      %717 = vmatpush1.msra.mxu0 0.0
      %718 = vmatprep.subr.mxu0 0.0
      %719 = vmatpush1.msra.mxu0 0.0
      %720 = vmatprep.subr.mxu0 0.0
      %721 = vmatpush1.msra.mxu0 0.0
      %722 = vmatprep.subr.mxu0 0.0
      %723 = vmatpush1.msra.mxu0 0.0
      %724 = vmatprep.subr.mxu0 0.0
      %725 = vmatpush1.msra.mxu0 0.0
      %726 = vmatprep.subr.mxu0 0.0
      %727 = vmatpush1.msra.mxu0 0.0
      %728 = vmatprep.subr.mxu0 0.0
      %729 = vmatpush1.msra.mxu0 0.0
      %730 = vmatprep.subr.mxu0 0.0
      %731 = vmatpush1.msra.mxu0 0.0
      %732 = vmatprep.subr.mxu0 0.0
      %733 = vmatpush1.msra.mxu0 0.0
      %734 = vmatprep.subr.mxu0 0.0
      %735 = vmatpush1.msra.mxu0 0.0
      %736 = vmatprep.mubr.f32.mxu0 0.0
      %737 = vmatmul.mubr.f32.gmra.mrb[0].mxu0 %v657
      %v738 = vpop.f32.mrb[0].mxu0
      %v739 = vadd.f32 %v653, %v738
      %v740 = vpop.f32.mrb[0].mxu0
      %v741 = vadd.f32 %v653, %v740
      %742 = vdwg.mxu0
      %743 = vmatprep.subr.mxu0 %v632
      %744 = vmatpush1.msra.mxu0 %v631
      %745 = vmatprep.subr.mxu0 %v636
      %746 = vmatpush1.msra.mxu0 %v635
      %747 = vmatprep.subr.mxu0 %v640
      %748 = vmatpush1.msra.mxu0 %v639
      %749 = vmatprep.subr.mxu0 %v644
      %750 = vmatpush1.msra.mxu0 %v643
      %751 = vmatprep.subr.mxu0 %v670
      %752 = vmatpush1.msra.mxu0 %v667
      %753 = vmatprep.subr.mxu0 0.0
      %754 = vmatpush1.msra.mxu0 0.0
      %755 = vmatprep.subr.mxu0 0.0
      %756 = vmatpush1.msra.mxu0 0.0
      %757 = vmatprep.subr.mxu0 0.0
      %758 = vmatpush1.msra.mxu0 0.0
      %759 = vmatprep.subr.mxu0 0.0
      %760 = vmatpush1.msra.mxu0 0.0
      %761 = vmatprep.subr.mxu0 0.0
      %762 = vmatpush1.msra.mxu0 0.0
      %763 = vmatprep.subr.mxu0 0.0
      %764 = vmatpush1.msra.mxu0 0.0
      %765 = vmatprep.subr.mxu0 0.0
      %766 = vmatpush1.msra.mxu0 0.0
      %767 = vmatprep.subr.mxu0 0.0
      %768 = vmatpush1.msra.mxu0 0.0
      %769 = vmatprep.subr.mxu0 0.0
      %770 = vmatpush1.msra.mxu0 0.0
      %771 = vmatprep.subr.mxu0 0.0
      %772 = vmatpush1.msra.mxu0 0.0
      %773 = vmatprep.subr.mxu0 0.0
      %774 = vmatpush1.msra.mxu0 0.0
      %775 = vmatprep.subr.mxu0 0.0
      %776 = vmatpush1.msra.mxu0 0.0
      %777 = vmatprep.subr.mxu0 0.0
      %778 = vmatpush1.msra.mxu0 0.0
      %779 = vmatprep.subr.mxu0 0.0
      %780 = vmatpush1.msra.mxu0 0.0
      %781 = vmatprep.subr.mxu0 0.0
      %782 = vmatpush1.msra.mxu0 0.0
      %783 = vmatprep.subr.mxu0 0.0
      %784 = vmatpush1.msra.mxu0 0.0
      %785 = vmatprep.subr.mxu0 0.0
      %786 = vmatpush1.msra.mxu0 0.0
      %787 = vmatprep.subr.mxu0 0.0
      %788 = vmatpush1.msra.mxu0 0.0
      %789 = vmatprep.subr.mxu0 0.0
      %790 = vmatpush1.msra.mxu0 0.0
      %791 = vmatprep.subr.mxu0 0.0
      %792 = vmatpush1.msra.mxu0 0.0
      %793 = vmatprep.subr.mxu0 0.0
      %794 = vmatpush1.msra.mxu0 0.0
      %795 = vmatprep.subr.mxu0 0.0
      %796 = vmatpush1.msra.mxu0 0.0
      %797 = vmatprep.subr.mxu0 0.0
      %798 = vmatpush1.msra.mxu0 0.0
      %799 = vmatprep.subr.mxu0 0.0
      %800 = vmatpush1.msra.mxu0 0.0
      %801 = vmatprep.subr.mxu0 0.0
      %802 = vmatpush1.msra.mxu0 0.0
      %803 = vmatprep.subr.mxu0 0.0
      %804 = vmatpush1.msra.mxu0 0.0
      %805 = vmatprep.subr.mxu0 0.0
      %806 = vmatpush1.msra.mxu0 0.0
      %807 = vmatprep.mubr.f32.mxu0 0.0
      %808 = vmatmul.mubr.f32.gmra.mrb[0].mxu0 %v657
      %v809 = vpop.f32.mrb[0].mxu0
      %v810 = vadd.f32 %v653, %v809
      %v811 = vpop.f32.mrb[0].mxu0
      %v812 = vadd.f32 %v653, %v811
      %813 = vdwg.mxu0
      %v814 = vadd.f32 %v739, %v428
      %v815 = vadd.f32 %v741, %v429
      %v816 = vadd.f32 %v810, %v430
      %v817 = vadd.f32 %v812, %v431
      %vm818 = vcmp.ge.f32.partialorder %v814, 0.0
      %vm819 = vcmp.ge.f32.partialorder %v815, 0.0
      %vm820 = vcmp.ge.f32.partialorder %v816, 0.0
      %vm821 = vcmp.ge.f32.partialorder %v817, 0.0
      %v822 = vsel %vm818, 1, 0
      %v823 = vsel %vm819, 1, 0
      %v824 = vsel %vm820, 1, 0
      %v825 = vsel %vm821, 1, 0
      %v826 = vcvt.s32.f32 %v822
      %v827 = vcvt.s32.f32 %v823
      %v828 = vcvt.s32.f32 %v824
      %v829 = vcvt.s32.f32 %v825
      %v830 = vpack.c.bf16 %v826, %v826
      %v831 = vpack.c.bf16 %v827, %v827
      %v832 = vpack.c.bf16 %v828, %v828
      %v833 = vpack.c.bf16 %v829, %v829
      %v838 = vunpack.c.l.b16 %v830
      %v839 = vunpack.c.l.b16 %v831
      %v840 = vunpack.c.l.b16 %v832
      %v841 = vunpack.c.l.b16 %v833
      %v842 = vpack.c.b16 %v839, %v838
      %v843 = vpack.c.b16 %v841, %v840
      %846 = vst [vmem:[%s351] sm:$0xff] %v842
      %847 = vst [vmem:[%s351 + $0x8] sm:$0xff] %v843
      %848 = vst [vmem:[%s361] sm:$0xff] %v814
      %849 = vst [vmem:[%s361 + $0x8] sm:$0xff] %v815
      %850 = vst [vmem:[%s361 + $0x10] sm:$0xff] %v816
      %851 = vst [vmem:[%s361 + $0x18] sm:$0xff] %v817
      %852 = vst [vmem:[#allocation2] sm:$0xff] %v414
      %853 = vst [vmem:[#allocation2 + $0x8] sm:$0xff] %v415
      %854 = vst [vmem:[#allocation3] sm:$0xff] %v408
      %855 = vst [vmem:[#allocation3 + $0x8] sm:$0xff] %v409
      %856 = vst [vmem:[#allocation4] sm:$0xff] %v428
      %857 = vst [vmem:[#allocation4 + $0x8] sm:$0xff] %v429
      %858 = vst [vmem:[#allocation4 + $0x10] sm:$0xff] %v430
      %859 = vst [vmem:[#allocation4 + $0x18] sm:$0xff] %v431
      %860 = vst [vmem:[#allocation5] sm:$0xff] %v826
      %861 = vst [vmem:[#allocation5 + $0x8] sm:$0xff] %v827
      %862 = vst [vmem:[#allocation5 + $0x10] sm:$0xff] %v828
      %863 = vst [vmem:[#allocation5 + $0x18] sm:$0xff] %v829
      %p864 = scmp.eq.s32.totalorder %s24, 7
      // Predicated region
      $region37: #{lif_forward_sequence.1} parent=31 // pred_check
        %p865 = pneg %p864
      $region38: #{lif_forward_sequence.1} parent=31 // pred_check_branch
        %867 = sbr.rel (%p865) target = $region40
      $region39: #{lif_forward_sequence.1} parent=31 // pred_region
        %868 = vst [vmem:[%s367] sm:$0xff] %v414
        %869 = vst [vmem:[%s367 + $0x8] sm:$0xff] %v415
        %870 = vst [vmem:[%s373] sm:$0xff] %v408
        %871 = vst [vmem:[%s373 + $0x8] sm:$0xff] %v409
        %872 = vst [vmem:[%s379] sm:$0xff] %v428
        %873 = vst [vmem:[%s379 + $0x8] sm:$0xff] %v429
        %874 = vst [vmem:[%s379 + $0x10] sm:$0xff] %v430
        %875 = vst [vmem:[%s379 + $0x18] sm:$0xff] %v431
      $region40: #{lif_forward_sequence.1} parent=31 // pred_fallthru
        _
      %s876 = smul.u32 4, %s23
      %p877 = scmp.lt.s32.totalorder %s24, 7
      %s878 = scalar_select %p877, %s24, 7
      %p879 = scmp.lt.s32.totalorder %s876, 3
      %s880 = scalar_select %p879, %s876, 3
      %s881 = smul.addr %s878, 4
      %s882 = sadd.s32 %s880, %s881
      %s883 = smul.addr %s882, 4
      %s884 = scalar_lea.vmem %s3, %s883
      %s885 = smul.u32 4, %s23
      %p886 = scmp.lt.s32.totalorder %s24, 7
      %s887 = scalar_select %p886, %s24, 7
      %p888 = scmp.lt.s32.totalorder %s885, 3
      %s889 = scalar_select %p888, %s885, 3
      %s890 = smul.addr %s887, 4
      %s891 = sadd.s32 %s889, %s890
      %s892 = smul.addr %s891, 8
      %s893 = scalar_lea.vmem %s4, %s892
      %s894 = smul.u32 4, %s23
      %p895 = scmp.lt.s32.totalorder %s894, 3
      %s896 = scalar_select %p895, %s894, 3
      %s897 = smul.addr %s896, 4
      %s898 = scalar_lea.vmem %s5, %s897
      %s899 = smul.u32 4, %s23
      %p900 = scmp.lt.s32.totalorder %s899, 3
      %s901 = scalar_select %p900, %s899, 3
      %s902 = smul.addr %s901, 4
      %s903 = scalar_lea.vmem %s6, %s902
      %s904 = smul.u32 4, %s23
      %p905 = scmp.lt.s32.totalorder %s904, 3
      %s906 = scalar_select %p905, %s904, 3
      %s907 = smul.addr %s906, 8
      %s908 = scalar_lea.vmem %s7, %s907
      // Predicated region
      $region41: #{lif_forward_sequence.1} parent=31 // pred_check
        %p909 = pneg %p121
      $region42: #{lif_forward_sequence.1} parent=31 // pred_check_branch
        %911 = sbr.rel (%p909) target = $region44
      $region43: #{lif_forward_sequence.1} parent=31 // pred_region
        %s912 = smul.u32 4, %s23
      $region44: #{lif_forward_sequence.1} parent=31 // pred_fallthru
        _
      // Predicated region
      $region45: #{lif_forward_sequence.1} parent=31 // pred_check
        %p913 = pneg %p149
      $region46: #{lif_forward_sequence.1} parent=31 // pred_check_branch
        %915 = sbr.rel (%p913) target = $region48
      $region47: #{lif_forward_sequence.1} parent=31 // pred_region
        %s916 = smul.u32 4, %s23
      $region48: #{lif_forward_sequence.1} parent=31 // pred_fallthru
        _
      // Predicated region
      $region49: #{lif_forward_sequence.1} parent=31 // pred_check
        %p917 = pneg %p175
      $region50: #{lif_forward_sequence.1} parent=31 // pred_check_branch
        %919 = sbr.rel (%p917) target = $region52
      $region51: #{lif_forward_sequence.1} parent=31 // pred_region
        %s920 = smul.u32 4, %s23
      $region52: #{lif_forward_sequence.1} parent=31 // pred_fallthru
        _
      // Predicated region
      $region53: #{lif_forward_sequence.1} parent=31 // pred_check
        %p921 = pneg %p201
      $region54: #{lif_forward_sequence.1} parent=31 // pred_check_branch
        %923 = sbr.rel (%p921) target = $region56
      $region55: #{lif_forward_sequence.1} parent=31 // pred_region
        %s924 = smul.u32 4, %s23
      $region56: #{lif_forward_sequence.1} parent=31 // pred_fallthru
        _
      // Predicated region
      $region57: #{lif_forward_sequence.1} parent=31 // pred_check
        %p925 = pneg %p227
      $region58: #{lif_forward_sequence.1} parent=31 // pred_check_branch
        %927 = sbr.rel (%p925) target = $region60
      $region59: #{lif_forward_sequence.1} parent=31 // pred_region
        %s928 = smul.u32 4, %s23
      $region60: #{lif_forward_sequence.1} parent=31 // pred_fallthru
        _
      // Predicated region
      $region61: #{lif_forward_sequence.1} parent=31 // pred_check
        %p929 = pneg %p175
      $region62: #{lif_forward_sequence.1} parent=31 // pred_check_branch
        %931 = sbr.rel (%p929) target = $region64
      $region63: #{lif_forward_sequence.1} parent=31 // pred_region
        %s932 = smul.u32 4, %s23
        %p933 = scmp.lt.s32.totalorder %s932, 3
        %s934 = scalar_select %p933, %s932, 3
        %s935 = smul.addr %s934, 4
        %s936 = scalar_lea.vmem %s5, %s935
      $region64: #{lif_forward_sequence.1} parent=31 // pred_fallthru
        _
      // Predicated region
      $region65: #{lif_forward_sequence.1} parent=31 // pred_check
        %p937 = pneg %p201
      $region66: #{lif_forward_sequence.1} parent=31 // pred_check_branch
        %939 = sbr.rel (%p937) target = $region68
      $region67: #{lif_forward_sequence.1} parent=31 // pred_region
        %s940 = smul.u32 4, %s23
        %p941 = scmp.lt.s32.totalorder %s940, 3
        %s942 = scalar_select %p941, %s940, 3
        %s943 = smul.addr %s942, 4
        %s944 = scalar_lea.vmem %s6, %s943
      $region68: #{lif_forward_sequence.1} parent=31 // pred_fallthru
        _
      // Predicated region
      $region69: #{lif_forward_sequence.1} parent=31 // pred_check
        %p945 = pneg %p227
      $region70: #{lif_forward_sequence.1} parent=31 // pred_check_branch
        %947 = sbr.rel (%p945) target = $region72
      $region71: #{lif_forward_sequence.1} parent=31 // pred_region
        %s948 = smul.u32 4, %s23
        %p949 = scmp.lt.s32.totalorder %s948, 3
        %s950 = scalar_select %p949, %s948, 3
        %s951 = smul.addr %s950, 8
        %s952 = scalar_lea.vmem %s7, %s951
      $region72: #{lif_forward_sequence.1} parent=31 // pred_fallthru
        _
    $region32: #{lif_forward_sequence.1} parent=5 // pred_fallthru
      _
    %p953 = scmp.le.s32.totalorder 2, %s14
    // Predicated region
    $region73: #{lif_forward_sequence.1} parent=5 // pred_check
      %p954 = pneg %p953
    $region74: #{lif_forward_sequence.1} parent=5 // pred_check_branch
      %956 = sbr.rel (%p954) target = $region76
    $region75: #{lif_forward_sequence.1} parent=5 // pred_region
      %s957 = ssub.s32 %s14, 2
      // Predicated region
      $region77: #{lif_forward_sequence.1} parent=75 // pred_check
        %p958 = pneg %p127
      $region78: #{lif_forward_sequence.1} parent=75 // pred_check_branch
        %960 = sbr.rel (%p958) target = $region80
      $region79: #{lif_forward_sequence.1} parent=75 // pred_region
        %s961 = smul.u32 4, %s25
        %p962 = scmp.lt.s32.totalorder %s26, 7
        %s963 = scalar_select %p962, %s26, 7
        %p964 = scmp.lt.s32.totalorder %s961, 3
        %s965 = scalar_select %p964, %s961, 3
        %s966 = smul.addr %s963, 4
        %s967 = sadd.s32 %s965, %s966
        %s968 = smul.addr %s967, 4
        %s969 = scalar_lea.vmem %s3, %s968
      $region80: #{lif_forward_sequence.1} parent=75 // pred_fallthru
        _
      // Predicated region
      $region81: #{lif_forward_sequence.1} parent=75 // pred_check
        %p970 = pneg %p155
      $region82: #{lif_forward_sequence.1} parent=75 // pred_check_branch
        %972 = sbr.rel (%p970) target = $region84
      $region83: #{lif_forward_sequence.1} parent=75 // pred_region
        %s973 = smul.u32 4, %s25
        %p974 = scmp.lt.s32.totalorder %s26, 7
        %s975 = scalar_select %p974, %s26, 7
        %p976 = scmp.lt.s32.totalorder %s973, 3
        %s977 = scalar_select %p976, %s973, 3
        %s978 = smul.addr %s975, 4
        %s979 = sadd.s32 %s977, %s978
        %s980 = smul.addr %s979, 8
        %s981 = scalar_lea.vmem %s4, %s980
      $region84: #{lif_forward_sequence.1} parent=75 // pred_fallthru
        _
    $region76: #{lif_forward_sequence.1} parent=5 // pred_fallthru
      _
  $region6: #{lif_forward_sequence.1} parent=0 // loop_footer
    %s18 = sadd.s32 1, %s14
  $region7: #{lif_forward_sequence.1} parent=0 // loop_footer_branch
    %13 = sbr.rel target = $region3
  $region8: #{lif_forward_sequence.1} parent=0 // loop_exit
    _

</llo_original>
